<compile_context>
chip_gen: v6e
topology: v6e:2x2x1
jax: 0.10.0
libtpu: 0.0.40
codegen_flags: <defaults>
</compile_context>

<pallas_src>
import jax
import jax.numpy as jnp
from jax.experimental import pallas as pl
from jax.experimental.pallas import tpu as pltpu


def _ce_kernel(logits_ref, labels_ref, alpha_ref, out_ref):
    """One (C_pad, TILE_M) column-block of transposed logits; rows on the lane axis."""
    i = pl.program_id(1)

    @pl.when(i == 0)
    def _():
        out_ref[...] = jnp.zeros_like(out_ref)

    logits = logits_ref[...].astype(jnp.float32)        # (C_pad, TM)
    labels = labels_ref[...]                            # (1, TM) int32
    alpha = alpha_ref[...]                              # (1, TM) f32

    # Numerically stable logsumexp over the (small, sublane) class axis.
    m = jnp.max(logits, axis=0, keepdims=True)          # (1, TM)
    lse = m + jnp.log(jnp.sum(jnp.exp(logits - m), axis=0, keepdims=True))

    # logits.gather(-1, labels): one-hot select along the sublane class axis.
    class_ids = jax.lax.broadcasted_iota(jnp.int32, logits.shape, 0)
    gathered = jnp.sum(jnp.where(class_ids == labels, logits, 0.0),
                       axis=0, keepdims=True)           # (1, TM)

    # Per-lane partial losses accumulated in the resident output block (pure VPU add).
    out_ref[...] += (alpha * (lse - gathered))[None]


def cross_entropy_pallas(logits, labels, class_weights, *, tile_m=None, splits=2):
    """logits: [M, C] float (f32/bf16), labels: [M] int, class_weights: [C] -> scalar f32."""
    M, C = logits.shape
    C_pad = ((C + 7) // 8) * 8                 # fill sublanes on the class axis
    elt = jnp.dtype(logits.dtype).itemsize

    # Big lane-dense row tiles: ~1 MiB of logits per grid step; clamp so tiny M
    # isn't over-padded.
    # TODO(synk): for very large C (e.g. LM vocab) add a class-tiling grid axis with
    # an online-logsumexp accumulator instead of a single (C, tile_m) block.
    if tile_m is None:
        budget = 1 << 20
        tile_m = min(32768, max(128, budget // (C_pad * elt)))
    tile_m = max(128, (tile_m // 128) * 128)
    tile_m = min(tile_m, ((M + 127) // 128) * 128)

    splits = max(1, int(splits))
    n_tiles = -(-M // tile_m)
    n_per = -(-n_tiles // splits)
    n_tiles = n_per * splits
    M_pad = n_tiles * tile_m

    labels = labels.astype(jnp.int32)
    alpha = class_weights.astype(jnp.float32)[labels]        # (M,) per-row weight

    # Lane-dense layout: classes on sublanes, rows on lanes.
    logits_t = logits.T                                      # (C, M)
    if C_pad > C:   # padded classes never win the max and never match a label
        logits_t = jnp.concatenate(
            [logits_t, jnp.full((C_pad - C, M), -1e30, logits.dtype)], axis=0)
    if M_pad > M:   # padded rows are masked out of the loss by alpha == 0
        logits_t = jnp.pad(logits_t, ((0, 0), (0, M_pad - M)))
    labels_p = jnp.pad(labels, (0, M_pad - M)).reshape(1, M_pad)
    alpha_p = jnp.pad(alpha, (0, M_pad - M)).reshape(1, M_pad)

    row_block = lambda p, i: (0, p * n_per + i)

    partials = pl.pallas_call(
        _ce_kernel,
        out_shape=jax.ShapeDtypeStruct((splits, 1, tile_m), jnp.float32),
        grid_spec=pltpu.PrefetchScalarGridSpec(
            num_scalar_prefetch=0,
            grid=(splits, n_per),                            # (cores, row tiles)
            in_specs=[
                pl.BlockSpec((C_pad, tile_m), row_block),    # logits (streamed)
                pl.BlockSpec((1, tile_m), row_block),        # labels
                pl.BlockSpec((1, tile_m), row_block),        # per-row weights
            ],
            out_specs=pl.BlockSpec((1, 1, tile_m), lambda p, i: (p, 0, 0)),
        ),
        compiler_params=pltpu.CompilerParams(
            dimension_semantics=("parallel", "arbitrary"),
            vmem_limit_bytes=32 * 1024 * 1024,
        ),
    )(logits_t, labels_p, alpha_p)

    # Single cross-lane reduction + mean over the true M rows (padding is zero).
    return jnp.sum(partials) / jnp.float32(M)


def cross_entropy_ref(logits, labels, class_weights):
    logits = logits.astype(jnp.float32)
    labels = labels.astype(jnp.int32)
    alpha = class_weights.astype(jnp.float32)[labels]
    gathered = jnp.take_along_axis(logits, labels[:, None], axis=1)[:, 0]
    lse = jax.scipy.special.logsumexp(logits, axis=1)
    return jnp.mean(alpha * (lse - gathered))


if __name__ == "__main__":
    key = jax.random.PRNGKey(0)
    k1, k2 = jax.random.split(key)

    M, C = 128, 8  # M predictions, C classes
    logits = jax.random.normal(k1, (M, C), dtype=jnp.float32)
    labels = jax.random.randint(k2, (M,), 0, C, dtype=jnp.int32)
    # deterministic "args.class_weights"
    class_weights = jnp.linspace(0.1, 1.0, C, dtype=jnp.float32)

    out = cross_entropy_pallas(logits, labels, class_weights)
    out = jax.block_until_ready(out)

    ref = cross_entropy_ref(logits, labels, class_weights)
    assert jnp.allclose(out, ref, rtol=1e-5, atol=1e-5), (out, ref)

    print("KERNEL_OK")
</pallas_src>

<mosaic_0001>
module attributes {stable_mosaic.version = 11 : i64} {
  func.func @_ce_kernel(%arg0: i32, %arg1: i32, %arg2: memref<8x128xf32, #tpu.memory_space<vmem>>, %arg3: memref<1x128xi32, #tpu.memory_space<vmem>>, %arg4: memref<1x128xf32, #tpu.memory_space<vmem>>, %arg5: memref<1x1x128xf32, #tpu.memory_space<vmem>>) attributes {dimension_semantics = [#tpu.dimension_semantics<parallel>, #tpu.dimension_semantics<arbitrary>], iteration_bounds = array<i64: 2, 1>, scalar_prefetch = 0 : i64, scratch_operands = 0 : i64, tpu.core_type = #tpu.core_type<tc>, window_params = [{transform_indices = @transform_0, window_bounds = array<i64: 8, 128>}, {transform_indices = @transform_1, window_bounds = array<i64: 1, 128>}, {transform_indices = @transform_2, window_bounds = array<i64: 1, 128>}, {transform_indices = @transform_3, window_bounds = array<i64: 1, 1, 128>}]} {
    %c0_i32 = arith.constant 0 : i32
    %0 = arith.cmpi eq, %arg1, %c0_i32 : i32
    %1 = arith.extui %0 : i1 to i32
    %c0_i32_0 = arith.constant 0 : i32
    %2 = arith.cmpi ne, %1, %c0_i32_0 : i32
    scf.if %2 {
      %cst_15 = arith.constant 0.000000e+00 : f32
      %28 = vector.broadcast %cst_15 : f32 to vector<1x1x128xf32>
      %c0_16 = arith.constant 0 : index
      %c0_17 = arith.constant 0 : index
      %c0_18 = arith.constant 0 : index
      %29 = vector.load %arg5[%c0_16, %c0_17, %c0_18] : memref<1x1x128xf32, #tpu.memory_space<vmem>>, vector<1x1x128xf32>
      tpu.vector_store %arg5[%c0_16, %c0_17, %c0_18], %28 {strides = array<i32>} : memref<1x1x128xf32, #tpu.memory_space<vmem>>, vector<1x1x128xf32>,
    } else {
    }
    %c0 = arith.constant 0 : index
    %c0_1 = arith.constant 0 : index
    %3 = vector.load %arg2[%c0, %c0_1] : memref<8x128xf32, #tpu.memory_space<vmem>>, vector<8x128xf32>
    %c0_2 = arith.constant 0 : index
    %c0_3 = arith.constant 0 : index
    %4 = vector.load %arg3[%c0_2, %c0_3] : memref<1x128xi32, #tpu.memory_space<vmem>>, vector<1x128xi32>
    %c0_4 = arith.constant 0 : index
    %c0_5 = arith.constant 0 : index
    %5 = vector.load %arg4[%c0_4, %c0_5] : memref<1x128xf32, #tpu.memory_space<vmem>>, vector<1x128xf32>
    %cst = arith.constant dense<0xFF800000> : vector<128xf32>
    %6 = vector.multi_reduction <maximumf>, %3, %cst [0] : vector<8x128xf32> to vector<128xf32>
    %7 = vector.shape_cast %6 : vector<128xf32> to vector<1x128xf32>
    %8 = vector.broadcast %7 : vector<1x128xf32> to vector<8x128xf32>
    %9 = arith.subf %3, %8 : vector<8x128xf32>
    %10 = math.exp %9 : vector<8x128xf32>
    %cst_6 = arith.constant dense<0.000000e+00> : vector<128xf32>
    %11 = vector.multi_reduction <add>, %10, %cst_6 [0] : vector<8x128xf32> to vector<128xf32>
    %12 = vector.shape_cast %11 : vector<128xf32> to vector<1x128xf32>
    %13 = math.log %12 : vector<1x128xf32>
    %14 = arith.addf %7, %13 : vector<1x128xf32>
    %15 = tpu.iota {dimensions = array<i32: 0>} : vector<8x128xi32>
    %16 = vector.broadcast %4 : vector<1x128xi32> to vector<8x128xi32>
    %17 = arith.cmpi eq, %15, %16 : vector<8x128xi32>
    %cst_7 = arith.constant 0.000000e+00 : f32
    %18 = vector.broadcast %cst_7 : f32 to vector<8x128xf32>
    %19 = arith.select %17, %3, %18 : vector<8x128xi1>, vector<8x128xf32>
    %cst_8 = arith.constant dense<0.000000e+00> : vector<128xf32>
    %20 = vector.multi_reduction <add>, %19, %cst_8 [0] : vector<8x128xf32> to vector<128xf32>
    %21 = vector.shape_cast %20 : vector<128xf32> to vector<1x128xf32>
    %c0_9 = arith.constant 0 : index
    %c0_10 = arith.constant 0 : index
    %c0_11 = arith.constant 0 : index
    %22 = vector.load %arg5[%c0_9, %c0_10, %c0_11] : memref<1x1x128xf32, #tpu.memory_space<vmem>>, vector<1x1x128xf32>
    %23 = arith.subf %14, %21 : vector<1x128xf32>
    %24 = arith.mulf %5, %23 : vector<1x128xf32>
    %25 = vector.shape_cast %24 : vector<1x128xf32> to vector<1x1x128xf32>
    %26 = arith.addf %22, %25 : vector<1x1x128xf32>
    %c0_12 = arith.constant 0 : index
    %c0_13 = arith.constant 0 : index
    %c0_14 = arith.constant 0 : index
    %27 = vector.load %arg5[%c0_12, %c0_13, %c0_14] : memref<1x1x128xf32, #tpu.memory_space<vmem>>, vector<1x1x128xf32>
    tpu.vector_store %arg5[%c0_12, %c0_13, %c0_14], %26 {strides = array<i32>} : memref<1x1x128xf32, #tpu.memory_space<vmem>>, vector<1x1x128xf32>,
    return
  }
  func.func @transform_0(%arg0: i32, %arg1: i32) -> (i32, i32) {
    %c1_i32 = arith.constant 1 : i32
    %0 = arith.muli %arg0, %c1_i32 : i32
    %1 = arith.addi %0, %arg1 : i32
    %c0_i32 = arith.constant 0 : i32
    %c0_i32_0 = arith.constant 0 : i32
    return %c0_i32, %1 : i32, i32
  }
  func.func @transform_1(%arg0: i32, %arg1: i32) -> (i32, i32) {
    %c1_i32 = arith.constant 1 : i32
    %0 = arith.muli %arg0, %c1_i32 : i32
    %1 = arith.addi %0, %arg1 : i32
    %c0_i32 = arith.constant 0 : i32
    %c0_i32_0 = arith.constant 0 : i32
    return %c0_i32, %1 : i32, i32
  }
  func.func @transform_2(%arg0: i32, %arg1: i32) -> (i32, i32) {
    %c1_i32 = arith.constant 1 : i32
    %0 = arith.muli %arg0, %c1_i32 : i32
    %1 = arith.addi %0, %arg1 : i32
    %c0_i32 = arith.constant 0 : i32
    %c0_i32_0 = arith.constant 0 : i32
    return %c0_i32, %1 : i32, i32
  }
  func.func @transform_3(%arg0: i32, %arg1: i32) -> (i32, i32, i32) {
    %c0_i32 = arith.constant 0 : i32
    %c0_i32_0 = arith.constant 0 : i32
    %c0_i32_1 = arith.constant 0 : i32
    return %arg0, %c0_i32, %c0_i32_0 : i32, i32, i32
  }
}

</mosaic_0001>

<llo_original>
// kernel: tpu_custom_call.1
$region0: #{tpu_custom_call.1}
  #allocation0 [shape = 'u32[]', space=smem, size = 0x4, offset = 0x4, fixed_abs, tag = 'smem constant byte address 0x4 - core index']
  #allocation1 [shape = 'u32[144,128]{1,0:T(1,128)}', space=vmem, size = 0x12000, scoped, tag = 'internal scratch']
  %s0 = inlined_call_operand.hbm [shape: f32[8,256], index: 0, kind: input, shape index: {}]
  %s1 = inlined_call_operand.hbm [shape: s32[1,256], index: 1, kind: input, shape index: {}]
  %s2 = inlined_call_operand.vmem [shape: f32[1,256], index: 2, kind: input, shape index: {}]
  %s3 = inlined_call_operand.hbm [shape: f32[2,1,128], index: 3, kind: output, shape index: {}]
  %s4 = sld [smem:[#allocation0]]
  $region57: #{tpu_custom_call.1} parent=0
    _
  %s6 = ssub.s32 1, %s4
  %s7 = scalar_select 0, %s6, %s4
  $region1: #{tpu_custom_call.1} parent=0
    #allocation2 [shape = 'u8[8192]{0}', space=vmem, size = 0x2000, scoped, tag = 'input window, operand 0']
    #allocation3 [shape = 's32[2]{0}', space=sflag, size = 0x8, scoped, tag = 'scoped memory for tpu_custom_call.1']
    #allocation4 [shape = 's32[2]{0}', space=sflag, size = 0x8, scoped, tag = 'scoped memory for tpu_custom_call.1']
    #allocation5 [shape = 'u8[1024]{0}', space=vmem, size = 0x400, scoped, tag = 'input window, operand 1']
    #allocation6 [shape = 's32[2]{0}', space=sflag, size = 0x8, scoped, tag = 'scoped memory for tpu_custom_call.1']
    #allocation7 [shape = 'u8[1024]{0}', space=vmem, size = 0x400, scoped, tag = 'output window, operand 0']
    %8 = vsyncpa [#allocation3], 0
    %s9 = scalar_lea.sflag [#allocation3], 1
    %10 = vsyncpa %s9, 0
    %11 = vsyncpa [#allocation6], 0
    %s12 = scalar_lea.sflag [#allocation6], 1
    %13 = vsyncpa %s12, 0
    %14 = vsyncpa [#allocation4], 0
    %s15 = scalar_lea.sflag [#allocation4], 1
    %16 = vsyncpa %s15, 0
    loop: start=0, step=1, limit=4
    $region2: #{tpu_custom_call.1} parent=1 // loop_pre_header
      _
    $region3: #{tpu_custom_call.1} parent=1 // loop_header
      %s18 = sphi 0, %s22
      %p19 = scmp.ge.s32.totalorder %s18, 4
      %s25 = sphi 0, %s37
      %s26 = sphi 0, %s33
      %s27 = sphi 0, %s25
      %s28 = sphi 0, %s26
      %s29 = sphi 0, %s27
      %s30 = sphi 0, %s28
      %s42 = sphi 0, %s44
      %s45 = sphi 0, %s42
      %s46 = sphi 0, %s45
      %s62 = sphi 0, %s46
      %s70 = sphi 0, %s72
      %s73 = sphi 0, %s70
      %s74 = sphi 0, %s73
      %s90 = sphi 0, %s74
      %s98 = sphi 0, %s100
      %s101 = sphi 0, %s98
      %s102 = sphi 0, %s101
      %s118 = sphi 0, %s102
      %s124 = sphi 0, %s126
      %s127 = sphi 0, %s124
      %s128 = sphi 0, %s127
      %s144 = sphi 0, %s128
    $region4: #{tpu_custom_call.1} parent=1 // loop_header_branch
      %21 = sbr.rel (%p19) target = $region8
    $region5: #{tpu_custom_call.1} parent=1 // loop_body
      %s23 = ssub.s32 %s18, 1
      %s24 = ssub.s32 %s18, 2
      %s31 = sadd.s32 1, %s26
      %p32 = scmp.ge.s32.totalorder %s31, 1
      %s33 = scalar_select %p32, 0, %s31
      %s34 = sadd.s32 1, %s25
      %s35 = scalar_select %p32, %s34, %s25
      %p36 = scmp.ge.s32.totalorder %s35, 2
      %s37 = scalar_select %p36, 0, %s35
      %s38 = sadd.s32 %s25, %s26
      %s39 = sadd.s32 %s37, %s33
      %s40 = ssub.s32 %s38, %s39
      %p41 = scmp.eq.s32.totalorder %s40, 0
      %s43 = sadd.s32 %s42, 1
      %s44 = scalar_select %p41, %s42, %s43
      %p47 = pneg %p41
      %p48 = scmp.eq.s32.totalorder %s18, 1
      %p49 = por %p47, %p48
      %p50 = scmp.ne.s32.totalorder %s42, %s45
      %p51 = scmp.eq.s32.totalorder %s18, 0
      %p52 = por %p50, %p51
      %p53 = scmp.ne.s32.totalorder %s42, %s45
      %p54 = scmp.eq.s32.totalorder %s23, 1
      %p55 = por %p53, %p54
      %p56 = scmp.ne.s32.totalorder %s45, %s46
      %p57 = scmp.eq.s32.totalorder %s23, 0
      %p58 = por %p56, %p57
      %p59 = scmp.ne.s32.totalorder %s45, %s46
      %p60 = scmp.eq.s32.totalorder %s24, 1
      %p61 = por %p59, %p60
      %p63 = scmp.ne.s32.totalorder %s46, %s62
      %p64 = scmp.eq.s32.totalorder %s24, 0
      %p65 = por %p63, %p64
      %s66 = sadd.s32 %s25, %s26
      %s67 = sadd.s32 %s37, %s33
      %s68 = ssub.s32 %s66, %s67
      %p69 = scmp.eq.s32.totalorder %s68, 0
      %s71 = sadd.s32 %s70, 1
      %s72 = scalar_select %p69, %s70, %s71
      %p75 = pneg %p69
      %p76 = scmp.eq.s32.totalorder %s18, 1
      %p77 = por %p75, %p76
      %p78 = scmp.ne.s32.totalorder %s70, %s73
      %p79 = scmp.eq.s32.totalorder %s18, 0
      %p80 = por %p78, %p79
      %p81 = scmp.ne.s32.totalorder %s70, %s73
      %p82 = scmp.eq.s32.totalorder %s23, 1
      %p83 = por %p81, %p82
      %p84 = scmp.ne.s32.totalorder %s73, %s74
      %p85 = scmp.eq.s32.totalorder %s23, 0
      %p86 = por %p84, %p85
      %p87 = scmp.ne.s32.totalorder %s73, %s74
      %p88 = scmp.eq.s32.totalorder %s24, 1
      %p89 = por %p87, %p88
      %p91 = scmp.ne.s32.totalorder %s74, %s90
      %p92 = scmp.eq.s32.totalorder %s24, 0
      %p93 = por %p91, %p92
      %s94 = sadd.s32 %s25, %s26
      %s95 = sadd.s32 %s37, %s33
      %s96 = ssub.s32 %s94, %s95
      %p97 = scmp.eq.s32.totalorder %s96, 0
      %s99 = sadd.s32 %s98, 1
      %s100 = scalar_select %p97, %s98, %s99
      %p103 = pneg %p97
      %p104 = scmp.eq.s32.totalorder %s18, 1
      %p105 = por %p103, %p104
      %p106 = scmp.ne.s32.totalorder %s98, %s101
      %p107 = scmp.eq.s32.totalorder %s18, 0
      %p108 = por %p106, %p107
      %p109 = scmp.ne.s32.totalorder %s98, %s101
      %p110 = scmp.eq.s32.totalorder %s23, 1
      %p111 = por %p109, %p110
      %p112 = scmp.ne.s32.totalorder %s101, %s102
      %p113 = scmp.eq.s32.totalorder %s23, 0
      %p114 = por %p112, %p113
      %p115 = scmp.ne.s32.totalorder %s101, %s102
      %p116 = scmp.eq.s32.totalorder %s24, 1
      %p117 = por %p115, %p116
      %p119 = scmp.ne.s32.totalorder %s102, %s118
      %p120 = scmp.eq.s32.totalorder %s24, 0
      %p121 = por %p119, %p120
      %s122 = ssub.s32 %s25, %s37
      %p123 = scmp.eq.s32.totalorder %s122, 0
      %s125 = sadd.s32 %s124, 1
      %s126 = scalar_select %p123, %s124, %s125
      %p129 = pneg %p123
      %p130 = scmp.eq.s32.totalorder %s18, 1
      %p131 = por %p129, %p130
      %p132 = scmp.ne.s32.totalorder %s124, %s127
      %p133 = scmp.eq.s32.totalorder %s18, 0
      %p134 = por %p132, %p133
      %p135 = scmp.ne.s32.totalorder %s124, %s127
      %p136 = scmp.eq.s32.totalorder %s23, 1
      %p137 = por %p135, %p136
      %p138 = scmp.ne.s32.totalorder %s127, %s128
      %p139 = scmp.eq.s32.totalorder %s23, 0
      %p140 = por %p138, %p139
      %p141 = scmp.ne.s32.totalorder %s127, %s128
      %p142 = scmp.eq.s32.totalorder %s24, 1
      %p143 = por %p141, %p142
      %p145 = scmp.ne.s32.totalorder %s128, %s144
      %p146 = scmp.eq.s32.totalorder %s24, 0
      %p147 = por %p145, %p146
      %p148 = scmp.le.s32.totalorder 1, %s18
      %p149 = scmp.lt.s32.totalorder %s18, 3
      %p150 = pnand %p148, %p149
      %p151 = pneg %p150
      // Predicated region
      $region9: #{tpu_custom_call.1} parent=5 // pred_check
        _
      $region10: #{tpu_custom_call.1} parent=5 // pred_check_branch
        %153 = sbr.rel (%p150) target = $region12
      $region11: #{tpu_custom_call.1} parent=5 // pred_region
        %s154 = ssub.s32 %s18, 1
      $region12: #{tpu_custom_call.1} parent=5 // pred_fallthru
        _
      %p155 = scmp.lt.s32.totalorder %s18, 2
      // Predicated region
      $region13: #{tpu_custom_call.1} parent=5 // pred_check
        %p156 = pneg %p155
      $region14: #{tpu_custom_call.1} parent=5 // pred_check_branch
        %158 = sbr.rel (%p156) target = $region16
      $region15: #{tpu_custom_call.1} parent=5 // pred_region
        // Predicated region
        $region17: #{tpu_custom_call.1} parent=15 // pred_check
          %p159 = pneg %p52
        $region18: #{tpu_custom_call.1} parent=15 // pred_check_branch
          %161 = sbr.rel (%p159) target = $region20
        $region19: #{tpu_custom_call.1} parent=15 // pred_region
          %s162 = sand.u32 %s42, 1
          %s163 = scalar_lea.sflag [#allocation3], %s162
          %s164 = sand.u32 %s42, 1
          %s165 = smul.addr %s164, 8
          %s166 = scalar_lea.vmem [#allocation2], %s165
          %s167 = sadd.s32 %s25, %s26
          %s169 = ssub.s32 128, 128
          %170 = vsyncadd %s163, %s169
          %s171 = smul.addr %s167, 128
          %s172 = scalar_lea.hbm %s0, %s171
          %s174 = sshll.u32 %s166, 4
          %s175 = int_to_ptr.vmem [resolvable:$true] %s174
          %177 = dma.hbm_to_vmem [thread:$0]  %s172, 128, %s175, %s163
        $region20: #{tpu_custom_call.1} parent=15 // pred_fallthru
          _
        // Predicated region
        $region21: #{tpu_custom_call.1} parent=15 // pred_check
          %p178 = pneg %p80
        $region22: #{tpu_custom_call.1} parent=15 // pred_check_branch
          %180 = sbr.rel (%p178) target = $region24
        $region23: #{tpu_custom_call.1} parent=15 // pred_region
          %s181 = sand.u32 %s70, 1
          %s182 = scalar_lea.sflag [#allocation6], %s181
          %s183 = sand.u32 %s70, 1
          %s184 = scalar_lea.vmem [#allocation5], %s183
          %s185 = sadd.s32 %s25, %s26
          %s187 = ssub.s32 16, 16
          %188 = vsyncadd %s182, %s187
          %s189 = smul.addr %s185, 16
          %s190 = scalar_lea.hbm %s1, %s189
          %s192 = sshll.u32 %s184, 4
          %s193 = int_to_ptr.vmem [resolvable:$true] %s192
          %195 = dma.hbm_to_vmem [thread:$0]  %s190, 16, %s193, %s182
        $region24: #{tpu_custom_call.1} parent=15 // pred_fallthru
          _
        // Predicated region
        $region25: #{tpu_custom_call.1} parent=15 // pred_check
          %p196 = pneg %p108
        $region26: #{tpu_custom_call.1} parent=15 // pred_check_branch
          %198 = sbr.rel (%p196) target = $region28
        $region27: #{tpu_custom_call.1} parent=15 // pred_region
          %s199 = sadd.s32 %s25, %s26
          %p200 = scmp.lt.s32.totalorder %s199, 1
          %s201 = scalar_select %p200, %s199, 1
          %s202 = scalar_lea.vmem %s2, %s201
          %s203 = sadd.s32 %s25, %s26
        $region28: #{tpu_custom_call.1} parent=15 // pred_fallthru
          _
      $region16: #{tpu_custom_call.1} parent=5 // pred_fallthru
        _
      %p204 = scmp.le.s32.totalorder 1, %s18
      %p205 = scmp.lt.s32.totalorder %s18, 3
      %p206 = pnand %p204, %p205
      %p207 = pneg %p206
      // Predicated region
      $region29: #{tpu_custom_call.1} parent=5 // pred_check
        _
      $region30: #{tpu_custom_call.1} parent=5 // pred_check_branch
        %209 = sbr.rel (%p206) target = $region32
      $region31: #{tpu_custom_call.1} parent=5 // pred_region
        %s210 = ssub.s32 %s18, 1
        %s211 = sand.u32 %s45, 1
        %s212 = scalar_lea.sflag [#allocation3], %s211
        %s213 = sand.u32 %s45, 1
        %s214 = smul.addr %s213, 8
        %s215 = scalar_lea.vmem [#allocation2], %s214
        // Predicated region
        $region33: #{tpu_custom_call.1} parent=31 // pred_check
          %p216 = pneg %p58
        $region34: #{tpu_custom_call.1} parent=31 // pred_check_branch
          %218 = sbr.rel (%p216) target = $region36
        $region35: #{tpu_custom_call.1} parent=31 // pred_region
          %219 = dma.done %s212, 128
        $region36: #{tpu_custom_call.1} parent=31 // pred_fallthru
          _
        %s220 = sand.u32 %s73, 1
        %s221 = scalar_lea.sflag [#allocation6], %s220
        %s222 = sand.u32 %s73, 1
        %s223 = scalar_lea.vmem [#allocation5], %s222
        // Predicated region
        $region37: #{tpu_custom_call.1} parent=31 // pred_check
          %p224 = pneg %p86
        $region38: #{tpu_custom_call.1} parent=31 // pred_check_branch
          %226 = sbr.rel (%p224) target = $region40
        $region39: #{tpu_custom_call.1} parent=31 // pred_region
          %227 = dma.done %s221, 16
        $region40: #{tpu_custom_call.1} parent=31 // pred_fallthru
          _
        %s228 = sand.u32 %s45, 1
        %s229 = scalar_lea.sflag [#allocation3], %s228
        %s230 = sand.u32 %s45, 1
        %s231 = smul.addr %s230, 8
        %s232 = scalar_lea.vmem [#allocation2], %s231
        %p233 = pneg %p58
        %p234 = pneg %p55
        %s235 = sand.u32 %s73, 1
        %s236 = scalar_lea.sflag [#allocation6], %s235
        %s237 = sand.u32 %s73, 1
        %s238 = scalar_lea.vmem [#allocation5], %s237
        %p239 = pneg %p86
        %p240 = pneg %p83
        %s241 = sadd.s32 %s27, %s28
        %p242 = scmp.lt.s32.totalorder %s241, 1
        %s243 = scalar_select %p242, %s241, 1
        %s244 = scalar_lea.vmem %s2, %s243
        %p245 = pneg %p114
        %p246 = pneg %p111
        %p247 = pneg %p140
        %p248 = pneg %p137
        %s249 = sand.u32 %s127, 1
        %s250 = scalar_lea.sflag [#allocation4], %s249
        %s251 = sand.u32 %s127, 1
        %s252 = scalar_lea.vmem [#allocation7], %s251
        %s253 = sadd.s32 %s27, %s28
        %s254 = sadd.s32 %s27, %s28
        %s255 = sadd.s32 %s27, %s28
        %p256 = scmp.lt.s32.totalorder %s255, 1
        %s257 = scalar_select %p256, %s255, 1
        %s258 = scalar_lea.vmem %s2, %s257
        %s259 = sadd.s32 %s27, %s28
        %p260 = scmp.eq.s32.totalorder %s28, 0
        // Predicated region
        $region41: #{tpu_custom_call.1} parent=31 // pred_check
          %p261 = pneg %p260
        $region42: #{tpu_custom_call.1} parent=31 // pred_check_branch
          %263 = sbr.rel (%p261) target = $region44
        $region43: #{tpu_custom_call.1} parent=31 // pred_region
          %264 = vst [vmem:[%s252] sm:$0x1] 0.0
        $region44: #{tpu_custom_call.1} parent=31 // pred_fallthru
          _
        %v265 = vld [vmem:[%s215] sm:$0xff]
        %v266 = vld [vmem:[%s223] sm:$0x1]
        %v267 = vld [vmem:[%s258] sm:$0x1]
        %v268 = vrot.slane %v265, 4
        %v269 = vmax.f32 %v265, %v268
        %v270 = vrot.slane %v269, 2
        %v271 = vmax.f32 %v269, %v270
        %v272 = vrot.slane %v271, 1
        %v273 = vmax.f32 %v271, %v272
        %v274 = vsub.f32 %v265, %v273
        %v275 = vmul.f32 %v274, 1.442695
        %v276 = vpow.pop %v275
        %v277 = vrot.slane %v276, 4
        %v278 = vadd.f32 %v276, %v277
        %v279 = vrot.slane %v278, 2
        %v280 = vadd.f32 %v278, %v279
        %v281 = vrot.slane %v280, 1
        %v282 = vadd.f32 %v280, %v281
        %v283 = vlog2.pop %v282
        %v284 = vmul.f32 %v283, 0.6931472
        %v285 = vadd.f32 %v273, %v284
        %v286 = vlaneseq
        %v287 = vshrl.u32 %v286, 7
        %v288 = vlaneseq
        %v289 = vshrl.u32 %v288, 7
        %v290 = vsub.s32 0, %v289
        %v291 = vrot.slane %v266, %v290
        %vm292 = vcmp.eq.s32.totalorder %v287, %v291
        %v293 = vsel %vm292, %v265, 0.0
        %v294 = vrot.slane %v293, 4
        %v295 = vadd.f32 %v293, %v294
        %v296 = vrot.slane %v295, 2
        %v297 = vadd.f32 %v295, %v296
        %v298 = vrot.slane %v297, 1
        %v299 = vadd.f32 %v297, %v298
        %v300 = vld [vmem:[%s252] sm:$0x1]
        %v301 = vsub.f32 %v285, %v299
        %v302 = vmul.f32 %v267, %v301
        %v303 = vadd.f32 %v300, %v302
        %304 = vst [vmem:[%s252] sm:$0x1] %v303
        %s305 = sand.u32 %s127, 1
        %s306 = scalar_lea.sflag [#allocation4], %s305
        %s307 = sand.u32 %s127, 1
        %s308 = scalar_lea.vmem [#allocation7], %s307
        // Predicated region
        $region45: #{tpu_custom_call.1} parent=31 // pred_check
          %p309 = pneg %p137
        $region46: #{tpu_custom_call.1} parent=31 // pred_check_branch
          %311 = sbr.rel (%p309) target = $region48
        $region47: #{tpu_custom_call.1} parent=31 // pred_region
          %s313 = ssub.s32 16, 16
          %314 = vsyncadd %s306, %s313
          %s315 = smul.addr %s27, 16
          %s316 = scalar_lea.hbm %s3, %s315
          %s318 = sshll.u32 %s308, 4
          %s319 = int_to_ptr.vmem [resolvable:$true] %s318
          %321 = dma.vmem_to_hbm [thread:$0]  %s319, 16, %s316, %s306
        $region48: #{tpu_custom_call.1} parent=31 // pred_fallthru
          _
      $region32: #{tpu_custom_call.1} parent=5 // pred_fallthru
        _
      %p322 = scmp.le.s32.totalorder 2, %s18
      // Predicated region
      $region49: #{tpu_custom_call.1} parent=5 // pred_check
        %p323 = pneg %p322
      $region50: #{tpu_custom_call.1} parent=5 // pred_check_branch
        %325 = sbr.rel (%p323) target = $region52
      $region51: #{tpu_custom_call.1} parent=5 // pred_region
        %s326 = ssub.s32 %s18, 2
        // Predicated region
        $region53: #{tpu_custom_call.1} parent=51 // pred_check
          %p327 = pneg %p143
        $region54: #{tpu_custom_call.1} parent=51 // pred_check_branch
          %329 = sbr.rel (%p327) target = $region56
        $region55: #{tpu_custom_call.1} parent=51 // pred_region
          %s330 = sand.u32 %s128, 1
          %s331 = scalar_lea.sflag [#allocation4], %s330
          %s332 = sand.u32 %s128, 1
          %s333 = scalar_lea.vmem [#allocation7], %s332
          %334 = dma.done %s331, 16
        $region56: #{tpu_custom_call.1} parent=51 // pred_fallthru
          _
      $region52: #{tpu_custom_call.1} parent=5 // pred_fallthru
        _
    $region6: #{tpu_custom_call.1} parent=1 // loop_footer
      %s22 = sadd.s32 1, %s18
    $region7: #{tpu_custom_call.1} parent=1 // loop_footer_branch
      %17 = sbr.rel target = $region3
    $region8: #{tpu_custom_call.1} parent=1 // loop_exit
      _
    %335 = vsyncpa [#allocation3], 1
    %s336 = scalar_lea.sflag [#allocation3], 1
    %337 = vsyncpa %s336, 1
    %338 = vsyncpa [#allocation6], 1
    %s339 = scalar_lea.sflag [#allocation6], 1
    %340 = vsyncpa %s339, 1
    %341 = vsyncpa [#allocation4], 1
    %s342 = scalar_lea.sflag [#allocation4], 1
    %343 = vsyncpa %s342, 1

</llo_original>
